<compile_context>
chip_gen: v6e
topology: v6e:2x2x1
jax: 0.10.0
libtpu: 0.0.40
codegen_flags: <defaults>
</compile_context>

<pallas_src>
import functools

import jax
import jax.numpy as jnp
from jax.experimental import pallas as pl
from jax.experimental.pallas import tpu as pltpu

NCORES = 2      # leading "parallel" grid axis -> both TensorCores on v7x
_N_STATS = 8    # sublane-padded number of partial-sum rows (5 used)


def _risk_body(pred_ref, lab_ref, m0_ref, m1_ref, out_ref, acc_ref):
    j = pl.program_id(1)

    @pl.when(j == 0)
    def _():
        acc_ref[...] = jnp.zeros_like(acc_ref)

    pred = pred_ref[...]                              # (BR, C) f32
    lab = lab_ref[...].astype(jnp.int32)              # (BR, C) int8 -> int32 in-register

    posf = (lab == 1).astype(jnp.float32)             # positive-node mask
    unlf = (lab == 0).astype(jnp.float32)             # unlabeled mask (padding == -1 excluded)

    # SigmoidLoss(reduction=False): loss(p, y) = sigmoid(-p * (2y - 1)).
    s_neg = jax.nn.sigmoid(-pred)                     # loss against label 1 (one EUP sigmoid)
    s_pos = 1.0 - s_neg                               # loss against label 0 (VPU, no 2nd sigmoid)

    if m0_ref is None:
        # recompute=False default: marginals = to_initial_priors(labels)
        m0 = unlf                                     # P(y=0) = 1 iff label == 0
        m1 = posf                                     # P(y=1) = 1 iff label == 1
    else:
        m0 = m0_ref[...]
        m1 = m1_ref[...]

    # Per-block partial sums reduced over the sublane axis -> (1, C) each.
    p_loss = jnp.sum(s_neg * posf, axis=0, keepdims=True)        # sum pos loss
    p_cnt = jnp.sum(posf, axis=0, keepdims=True)                 # count pos
    u_plus = jnp.sum(s_neg * m1 * unlf, axis=0, keepdims=True)   # weighted plus-loss (unl)
    u_minus = jnp.sum(s_pos * m0 * unlf, axis=0, keepdims=True)  # weighted minus-loss (unl)
    u_cnt = jnp.sum(unlf, axis=0, keepdims=True)                 # count unl
    pad = jnp.zeros((_N_STATS - 5,) + p_cnt.shape[1:], jnp.float32)

    # One full-tile accumulate per block.
    acc_ref[...] += jnp.concatenate(
        [p_loss, p_cnt, u_plus, u_minus, u_cnt, pad], axis=0)

    @pl.when(j == pl.num_programs(1) - 1)
    def _():
        # Per-core partial sums; ratios are formed after the cross-core combine.
        out_ref[...] = jnp.sum(acc_ref[...], axis=1, keepdims=True)   # (8, 1)


def _kernel_derived(pred_ref, lab_ref, out_ref, acc_ref):
    _risk_body(pred_ref, lab_ref, None, None, out_ref, acc_ref)


def _kernel_marginals(pred_ref, lab_ref, m0_ref, m1_ref, out_ref, acc_ref):
    _risk_body(pred_ref, lab_ref, m0_ref, m1_ref, out_ref, acc_ref)


def _pad_reshape(x, n_pad, rows, cols, fill):
    n = x.shape[0]
    if n_pad != n:
        x = jnp.pad(x, (0, n_pad - n), constant_values=fill)
    return x.reshape(rows, cols)


@functools.partial(jax.jit, static_argnames=("lanes", "max_block_rows"))
def belief_risk_estimator(predictions, labels, marginals=None, *,
                          lanes=512, max_block_rows=256):
    """predictions: (N,) f32, labels: (N,) int, marginals: (N, 2) f32 or None.

    marginals=None reproduces the module's recompute=False default
    (marginals = to_initial_priors(labels), derived in-kernel, 5 B/node streamed).
    Passing marginals covers the recompute=True / learned-marginals case.
    Note: the torch module derives its marginals from the __init__-time labels;
    the derived path assumes they are the same labels passed to forward().
    """
    n = predictions.shape[0]
    C = lanes
    assert C % 128 == 0 and max_block_rows % 32 == 0

    rows_needed = max(1, pl.cdiv(n, C))
    rows_per_core = pl.cdiv(rows_needed, NCORES)
    # Block rows: multiple of 32 (int8 sublane packing), capped for VMEM budget.
    block_rows = min(max_block_rows, 32 * pl.cdiv(rows_per_core, 32))
    blocks_per_core = pl.cdiv(rows_per_core, block_rows)
    rows_per_core = block_rows * blocks_per_core
    R = NCORES * rows_per_core
    n_pad = R * C

    pred2 = _pad_reshape(predictions.astype(jnp.float32), n_pad, R, C, 0.0)
    lab2 = _pad_reshape(labels.astype(jnp.int8), n_pad, R, C, -1)  # -1 => outside both masks

    node_map = lambda c, j: (c * blocks_per_core + j, 0)
    in_arrays = [pred2, lab2]
    in_specs = [pl.BlockSpec((block_rows, C), node_map),
                pl.BlockSpec((block_rows, C), node_map)]

    if marginals is None:
        kernel = _kernel_derived
    else:
        kernel = _kernel_marginals
        m = marginals.astype(jnp.float32)
        in_arrays += [_pad_reshape(m[:, 0], n_pad, R, C, 0.0),
                      _pad_reshape(m[:, 1], n_pad, R, C, 0.0)]
        in_specs += [pl.BlockSpec((block_rows, C), node_map),
                     pl.BlockSpec((block_rows, C), node_map)]

    parts = pl.pallas_call(
        kernel,
        out_shape=jax.ShapeDtypeStruct((NCORES * _N_STATS, 1), jnp.float32),
        grid_spec=pltpu.PrefetchScalarGridSpec(
            num_scalar_prefetch=0,
            grid=(NCORES, blocks_per_core),
            in_specs=in_specs,
            out_specs=pl.BlockSpec((_N_STATS, 1), lambda c, j: (c, 0)),
            scratch_shapes=[pltpu.VMEM((_N_STATS, C), jnp.float32)],
        ),
        compiler_params=pltpu.CompilerParams(
            dimension_semantics=("parallel", "arbitrary")),
    )(*in_arrays)

    sums = jnp.sum(parts.reshape(NCORES, _N_STATS), axis=0)
    # Matches the module: NaN if there are no positive or no unlabeled nodes.
    r_hat_plus_p = sums[0] / sums[1]
    r_hat_u = (sums[2] + sums[3]) / sums[4]
    return r_hat_plus_p + r_hat_u


def to_initial_priors(labels):
    """Deterministic marginals init (module's recompute=False path), plain JAX glue."""
    lab = labels.astype(jnp.int32)
    p0 = (lab == 0).astype(jnp.float32)
    p1 = (lab == 1).astype(jnp.float32)
    return jnp.stack([p0, p1], axis=1)


def _reference(predictions, labels, marginals):
    s_neg = jax.nn.sigmoid(-predictions)
    s_pos = jax.nn.sigmoid(predictions)
    pos = labels == 1
    unl = labels == 0
    r_p = jnp.sum(jnp.where(pos, s_neg, 0.0)) / jnp.sum(pos)
    r_u1 = jnp.sum(jnp.where(unl, s_neg * marginals[:, 1], 0.0)) / jnp.sum(unl)
    r_u0 = jnp.sum(jnp.where(unl, s_pos * marginals[:, 0], 0.0)) / jnp.sum(unl)
    return r_p + r_u1 + r_u0


if __name__ == "__main__":
    key = jax.random.PRNGKey(0)
    k1, k2, k3, k4 = jax.random.split(key, 4)

    # 1) Small graph, default path (marginals derived in-kernel == to_initial_priors).
    n_nodes = 300
    predictions = jax.random.normal(k1, (n_nodes,), dtype=jnp.float32)
    labels = jax.random.bernoulli(k2, p=0.3, shape=(n_nodes,)).astype(jnp.int8)

    risk = belief_risk_estimator(predictions, labels)
    risk = jax.block_until_ready(risk)
    ref = _reference(predictions, labels, to_initial_priors(labels))
    assert jnp.allclose(risk, ref, atol=1e-4, rtol=1e-4), (risk, ref)

    # 2) Explicit-marginals path (covers recompute=True / BP-produced marginals).
    raw = jax.random.uniform(k3, (n_nodes,), dtype=jnp.float32)
    marginals = jnp.stack([raw, 1.0 - raw], axis=1)
    risk_m = belief_risk_estimator(predictions, labels, marginals)
    risk_m = jax.block_until_ready(risk_m)
    ref_m = _reference(predictions, labels, marginals)
    assert jnp.allclose(risk_m, ref_m, atol=1e-4, rtol=1e-4), (risk_m, ref_m)

    # 3) Multi-block reduction path (several grid steps per core, both cores busy),
    #    exercised at a still-small node count via a smaller tile.
    n_big = 40_000
    predictions_b = jax.random.normal(k4, (n_big,), dtype=jnp.float32)
    labels_b = jax.random.bernoulli(k2, p=0.25, shape=(n_big,)).astype(jnp.int8)
    risk_b = belief_risk_estimator(predictions_b, labels_b,
                                   lanes=128, max_block_rows=32)
    risk_b = jax.block_until_ready(risk_b)
    ref_b = _reference(predictions_b, labels_b, to_initial_priors(labels_b))
    assert jnp.allclose(risk_b, ref_b, atol=1e-4, rtol=1e-4), (risk_b, ref_b)

    print("KERNEL_OK")
</pallas_src>

<mosaic_0001>
module attributes {stable_mosaic.version = 11 : i64} {
  func.func @_kernel_derived(%arg0: i32, %arg1: i32, %arg2: memref<32x512xf32, #tpu.memory_space<vmem>>, %arg3: memref<32x512xi8, #tpu.memory_space<vmem>>, %arg4: memref<8x1xf32, #tpu.memory_space<vmem>>, %arg5: memref<8x512xf32, #tpu.memory_space<vmem>>) attributes {dimension_semantics = [#tpu.dimension_semantics<parallel>, #tpu.dimension_semantics<arbitrary>], iteration_bounds = array<i64: 2, 1>, scalar_prefetch = 0 : i64, scratch_operands = 1 : i64, tpu.core_type = #tpu.core_type<tc>, window_params = [{transform_indices = @transform_0, window_bounds = array<i64: 32, 512>}, {transform_indices = @transform_1, window_bounds = array<i64: 32, 512>}, {transform_indices = @transform_2, window_bounds = array<i64: 8, 1>}]} {
    %c0_i32 = arith.constant 0 : i32
    %0 = arith.cmpi eq, %arg1, %c0_i32 : i32
    %1 = arith.extui %0 : i1 to i32
    %c0_i32_0 = arith.constant 0 : i32
    %2 = arith.cmpi ne, %1, %c0_i32_0 : i32
    scf.if %2 {
      %cst_19 = arith.constant 0.000000e+00 : f32
      %46 = vector.broadcast %cst_19 : f32 to vector<8x512xf32>
      %c0_20 = arith.constant 0 : index
      %c0_21 = arith.constant 0 : index
      %47 = vector.load %arg5[%c0_20, %c0_21] : memref<8x512xf32, #tpu.memory_space<vmem>>, vector<8x512xf32>
      tpu.vector_store %arg5[%c0_20, %c0_21], %46 {strides = array<i32>} : memref<8x512xf32, #tpu.memory_space<vmem>>, vector<8x512xf32>,
    } else {
    }
    %c0 = arith.constant 0 : index
    %c0_1 = arith.constant 0 : index
    %3 = vector.load %arg2[%c0, %c0_1] : memref<32x512xf32, #tpu.memory_space<vmem>>, vector<32x512xf32>
    %c0_2 = arith.constant 0 : index
    %c0_3 = arith.constant 0 : index
    %4 = vector.load %arg3[%c0_2, %c0_3] : memref<32x512xi8, #tpu.memory_space<vmem>>, vector<32x512xi8>
    %5 = arith.extsi %4 : vector<32x512xi8> to vector<32x512xi32>
    %c1_i32 = arith.constant 1 : i32
    %6 = vector.broadcast %c1_i32 : i32 to vector<32x512xi32>
    %7 = arith.cmpi eq, %5, %6 : vector<32x512xi32>
    %8 = arith.extui %7 : vector<32x512xi1> to vector<32x512xi32>
    %9 = arith.sitofp %8 : vector<32x512xi32> to vector<32x512xf32>
    %c0_i32_4 = arith.constant 0 : i32
    %10 = vector.broadcast %c0_i32_4 : i32 to vector<32x512xi32>
    %11 = arith.cmpi eq, %5, %10 : vector<32x512xi32>
    %12 = arith.extui %11 : vector<32x512xi1> to vector<32x512xi32>
    %13 = arith.sitofp %12 : vector<32x512xi32> to vector<32x512xf32>
    %cst = arith.constant 0.000000e+00 : f32
    %14 = vector.broadcast %cst : f32 to vector<32x512xf32>
    %15 = arith.subf %14, %3 : vector<32x512xf32>
    %16 = arith.negf %15 : vector<32x512xf32>
    %17 = math.exp %16 : vector<32x512xf32>
    %cst_5 = arith.constant 1.000000e+00 : f32
    %18 = vector.broadcast %cst_5 : f32 to vector<32x512xf32>
    %19 = arith.addf %18, %17 : vector<32x512xf32>
    %20 = arith.divf %18, %19 : vector<32x512xf32>
    %cst_6 = arith.constant 1.000000e+00 : f32
    %21 = vector.broadcast %cst_6 : f32 to vector<32x512xf32>
    %22 = arith.subf %21, %20 : vector<32x512xf32>
    %23 = arith.mulf %20, %9 : vector<32x512xf32>
    %cst_7 = arith.constant dense<0.000000e+00> : vector<512xf32>
    %24 = vector.multi_reduction <add>, %23, %cst_7 [0] : vector<32x512xf32> to vector<512xf32>
    %25 = vector.shape_cast %24 : vector<512xf32> to vector<1x512xf32>
    %cst_8 = arith.constant dense<0.000000e+00> : vector<512xf32>
    %26 = vector.multi_reduction <add>, %9, %cst_8 [0] : vector<32x512xf32> to vector<512xf32>
    %27 = vector.shape_cast %26 : vector<512xf32> to vector<1x512xf32>
    %28 = arith.mulf %20, %9 : vector<32x512xf32>
    %29 = arith.mulf %28, %13 : vector<32x512xf32>
    %cst_9 = arith.constant dense<0.000000e+00> : vector<512xf32>
    %30 = vector.multi_reduction <add>, %29, %cst_9 [0] : vector<32x512xf32> to vector<512xf32>
    %31 = vector.shape_cast %30 : vector<512xf32> to vector<1x512xf32>
    %32 = arith.mulf %22, %13 : vector<32x512xf32>
    %33 = arith.mulf %32, %13 : vector<32x512xf32>
    %cst_10 = arith.constant dense<0.000000e+00> : vector<512xf32>
    %34 = vector.multi_reduction <add>, %33, %cst_10 [0] : vector<32x512xf32> to vector<512xf32>
    %35 = vector.shape_cast %34 : vector<512xf32> to vector<1x512xf32>
    %cst_11 = arith.constant dense<0.000000e+00> : vector<512xf32>
    %36 = vector.multi_reduction <add>, %13, %cst_11 [0] : vector<32x512xf32> to vector<512xf32>
    %37 = vector.shape_cast %36 : vector<512xf32> to vector<1x512xf32>
    %cst_12 = arith.constant 0.000000e+00 : f32
    %38 = vector.broadcast %cst_12 : f32 to vector<3x512xf32>
    %c0_13 = arith.constant 0 : index
    %c0_14 = arith.constant 0 : index
    %39 = vector.load %arg5[%c0_13, %c0_14] : memref<8x512xf32, #tpu.memory_space<vmem>>, vector<8x512xf32>
    %40 = tpu.concatenate %25, %27, %31, %35, %37, %38 in 0 : vector<1x512xf32>, vector<1x512xf32>, vector<1x512xf32>, vector<1x512xf32>, vector<1x512xf32>, vector<3x512xf32> -> vector<8x512xf32>
    %41 = arith.addf %39, %40 : vector<8x512xf32>
    %c0_15 = arith.constant 0 : index
    %c0_16 = arith.constant 0 : index
    %42 = vector.load %arg5[%c0_15, %c0_16] : memref<8x512xf32, #tpu.memory_space<vmem>>, vector<8x512xf32>
    tpu.vector_store %arg5[%c0_15, %c0_16], %41 {strides = array<i32>} : memref<8x512xf32, #tpu.memory_space<vmem>>, vector<8x512xf32>,
    %c0_i32_17 = arith.constant 0 : i32
    %43 = arith.cmpi eq, %arg1, %c0_i32_17 : i32
    %44 = arith.extui %43 : i1 to i32
    %c0_i32_18 = arith.constant 0 : i32
    %45 = arith.cmpi ne, %44, %c0_i32_18 : i32
    scf.if %45 {
      %c0_19 = arith.constant 0 : index
      %c0_20 = arith.constant 0 : index
      %46 = vector.load %arg5[%c0_19, %c0_20] : memref<8x512xf32, #tpu.memory_space<vmem>>, vector<8x512xf32>
      %cst_21 = arith.constant dense<0.000000e+00> : vector<8xf32>
      %47 = vector.multi_reduction <add>, %46, %cst_21 [1] : vector<8x512xf32> to vector<8xf32>
      %48 = vector.shape_cast %47 : vector<8xf32> to vector<8x1xf32>
      %c0_22 = arith.constant 0 : index
      %c0_23 = arith.constant 0 : index
      %49 = vector.load %arg4[%c0_22, %c0_23] : memref<8x1xf32, #tpu.memory_space<vmem>>, vector<8x1xf32>
      tpu.vector_store %arg4[%c0_22, %c0_23], %48 {strides = array<i32>} : memref<8x1xf32, #tpu.memory_space<vmem>>, vector<8x1xf32>,
    } else {
    }
    return
  }
  func.func @transform_0(%arg0: i32, %arg1: i32) -> (i32, i32) {
    %c1_i32 = arith.constant 1 : i32
    %0 = arith.muli %arg0, %c1_i32 : i32
    %1 = arith.addi %0, %arg1 : i32
    %c0_i32 = arith.constant 0 : i32
    %c0_i32_0 = arith.constant 0 : i32
    return %1, %c0_i32 : i32, i32
  }
  func.func @transform_1(%arg0: i32, %arg1: i32) -> (i32, i32) {
    %c1_i32 = arith.constant 1 : i32
    %0 = arith.muli %arg0, %c1_i32 : i32
    %1 = arith.addi %0, %arg1 : i32
    %c0_i32 = arith.constant 0 : i32
    %c0_i32_0 = arith.constant 0 : i32
    return %1, %c0_i32 : i32, i32
  }
  func.func @transform_2(%arg0: i32, %arg1: i32) -> (i32, i32) {
    %c0_i32 = arith.constant 0 : i32
    %c0_i32_0 = arith.constant 0 : i32
    return %arg0, %c0_i32 : i32, i32
  }
}

</mosaic_0001>

<llo_original>
// kernel: belief_risk_estimator.1
$region0: #{belief_risk_estimator.1}
  #allocation0 [shape = 'u32[]', space=smem, size = 0x4, offset = 0x4, fixed_abs, tag = 'smem constant byte address 0x4 - core index']
  #allocation1 [shape = 'u32[144,128]{1,0:T(1,128)}', space=vmem, size = 0x12000, scoped, tag = 'internal scratch']
  #allocation2 [shape = 'f32[8,512]{1,0:T(8,128)}', space=vmem, size = 0x4000, scoped, tag = 'scratch operand']
  %s0 = inlined_call_operand.vmem [shape: f32[64,512], index: 0, kind: input, shape index: {}]
  %s1 = inlined_call_operand.vmem [shape: s8[64,512], index: 1, kind: input, shape index: {}]
  %s2 = inlined_call_operand.vmem [shape: f32[16,1], index: 2, kind: output, shape index: {}]
  %s3 = sld [smem:[#allocation0]]
  $region49: #{belief_risk_estimator.1} parent=0
    _
  %s5 = ssub.s32 1, %s3
  %s6 = scalar_select 0, %s5, %s3
  loop: start=0, step=1, limit=4
  $region2: #{belief_risk_estimator.1} parent=0 // loop_pre_header
    _
  $region3: #{belief_risk_estimator.1} parent=0 // loop_header
    %s8 = sphi 0, %s12
    %p9 = scmp.ge.s32.totalorder %s8, 4
    %s15 = sphi 0, %s27
    %s16 = sphi 0, %s23
    %s17 = sphi 0, %s15
    %s18 = sphi 0, %s16
    %s19 = sphi 0, %s17
    %s20 = sphi 0, %s18
    %s32 = sphi 0, %s34
    %s35 = sphi 0, %s32
    %s36 = sphi 0, %s35
    %s52 = sphi 0, %s36
    %s60 = sphi 0, %s62
    %s63 = sphi 0, %s60
    %s64 = sphi 0, %s63
    %s80 = sphi 0, %s64
    %s86 = sphi 0, %s88
    %s89 = sphi 0, %s86
    %s90 = sphi 0, %s89
    %s106 = sphi 0, %s90
  $region4: #{belief_risk_estimator.1} parent=0 // loop_header_branch
    %11 = sbr.rel (%p9) target = $region8
  $region5: #{belief_risk_estimator.1} parent=0 // loop_body
    %s13 = ssub.s32 %s8, 1
    %s14 = ssub.s32 %s8, 2
    %s21 = sadd.s32 1, %s16
    %p22 = scmp.ge.s32.totalorder %s21, 1
    %s23 = scalar_select %p22, 0, %s21
    %s24 = sadd.s32 1, %s15
    %s25 = scalar_select %p22, %s24, %s15
    %p26 = scmp.ge.s32.totalorder %s25, 2
    %s27 = scalar_select %p26, 0, %s25
    %s28 = sadd.s32 %s15, %s16
    %s29 = sadd.s32 %s27, %s23
    %s30 = ssub.s32 %s28, %s29
    %p31 = scmp.eq.s32.totalorder %s30, 0
    %s33 = sadd.s32 %s32, 1
    %s34 = scalar_select %p31, %s32, %s33
    %p37 = pneg %p31
    %p38 = scmp.eq.s32.totalorder %s8, 1
    %p39 = por %p37, %p38
    %p40 = scmp.ne.s32.totalorder %s32, %s35
    %p41 = scmp.eq.s32.totalorder %s8, 0
    %p42 = por %p40, %p41
    %p43 = scmp.ne.s32.totalorder %s32, %s35
    %p44 = scmp.eq.s32.totalorder %s13, 1
    %p45 = por %p43, %p44
    %p46 = scmp.ne.s32.totalorder %s35, %s36
    %p47 = scmp.eq.s32.totalorder %s13, 0
    %p48 = por %p46, %p47
    %p49 = scmp.ne.s32.totalorder %s35, %s36
    %p50 = scmp.eq.s32.totalorder %s14, 1
    %p51 = por %p49, %p50
    %p53 = scmp.ne.s32.totalorder %s36, %s52
    %p54 = scmp.eq.s32.totalorder %s14, 0
    %p55 = por %p53, %p54
    %s56 = sadd.s32 %s15, %s16
    %s57 = sadd.s32 %s27, %s23
    %s58 = ssub.s32 %s56, %s57
    %p59 = scmp.eq.s32.totalorder %s58, 0
    %s61 = sadd.s32 %s60, 1
    %s62 = scalar_select %p59, %s60, %s61
    %p65 = pneg %p59
    %p66 = scmp.eq.s32.totalorder %s8, 1
    %p67 = por %p65, %p66
    %p68 = scmp.ne.s32.totalorder %s60, %s63
    %p69 = scmp.eq.s32.totalorder %s8, 0
    %p70 = por %p68, %p69
    %p71 = scmp.ne.s32.totalorder %s60, %s63
    %p72 = scmp.eq.s32.totalorder %s13, 1
    %p73 = por %p71, %p72
    %p74 = scmp.ne.s32.totalorder %s63, %s64
    %p75 = scmp.eq.s32.totalorder %s13, 0
    %p76 = por %p74, %p75
    %p77 = scmp.ne.s32.totalorder %s63, %s64
    %p78 = scmp.eq.s32.totalorder %s14, 1
    %p79 = por %p77, %p78
    %p81 = scmp.ne.s32.totalorder %s64, %s80
    %p82 = scmp.eq.s32.totalorder %s14, 0
    %p83 = por %p81, %p82
    %s84 = ssub.s32 %s15, %s27
    %p85 = scmp.eq.s32.totalorder %s84, 0
    %s87 = sadd.s32 %s86, 1
    %s88 = scalar_select %p85, %s86, %s87
    %p91 = pneg %p85
    %p92 = scmp.eq.s32.totalorder %s8, 1
    %p93 = por %p91, %p92
    %p94 = scmp.ne.s32.totalorder %s86, %s89
    %p95 = scmp.eq.s32.totalorder %s8, 0
    %p96 = por %p94, %p95
    %p97 = scmp.ne.s32.totalorder %s86, %s89
    %p98 = scmp.eq.s32.totalorder %s13, 1
    %p99 = por %p97, %p98
    %p100 = scmp.ne.s32.totalorder %s89, %s90
    %p101 = scmp.eq.s32.totalorder %s13, 0
    %p102 = por %p100, %p101
    %p103 = scmp.ne.s32.totalorder %s89, %s90
    %p104 = scmp.eq.s32.totalorder %s14, 1
    %p105 = por %p103, %p104
    %p107 = scmp.ne.s32.totalorder %s90, %s106
    %p108 = scmp.eq.s32.totalorder %s14, 0
    %p109 = por %p107, %p108
    %p110 = scmp.le.s32.totalorder 1, %s8
    %p111 = scmp.lt.s32.totalorder %s8, 3
    %p112 = pnand %p110, %p111
    %p113 = pneg %p112
    // Predicated region
    $region9: #{belief_risk_estimator.1} parent=5 // pred_check
      _
    $region10: #{belief_risk_estimator.1} parent=5 // pred_check_branch
      %115 = sbr.rel (%p112) target = $region12
    $region11: #{belief_risk_estimator.1} parent=5 // pred_region
      %s116 = ssub.s32 %s8, 1
    $region12: #{belief_risk_estimator.1} parent=5 // pred_fallthru
      _
    %p117 = scmp.lt.s32.totalorder %s8, 2
    // Predicated region
    $region13: #{belief_risk_estimator.1} parent=5 // pred_check
      %p118 = pneg %p117
    $region14: #{belief_risk_estimator.1} parent=5 // pred_check_branch
      %120 = sbr.rel (%p118) target = $region16
    $region15: #{belief_risk_estimator.1} parent=5 // pred_region
      // Predicated region
      $region17: #{belief_risk_estimator.1} parent=15 // pred_check
        %p121 = pneg %p42
      $region18: #{belief_risk_estimator.1} parent=15 // pred_check_branch
        %123 = sbr.rel (%p121) target = $region20
      $region19: #{belief_risk_estimator.1} parent=15 // pred_region
        %s124 = sadd.s32 %s15, %s16
        %s125 = smul.u32 4, %s124
        %p126 = scmp.lt.s32.totalorder %s125, 7
        %s127 = scalar_select %p126, %s125, 7
        %s128 = smul.addr %s127, 4
        %s129 = smul.addr %s128, 8
        %s130 = scalar_lea.vmem %s0, %s129
        %s131 = sadd.s32 %s15, %s16
        %s132 = smul.u32 4, %s131
      $region20: #{belief_risk_estimator.1} parent=15 // pred_fallthru
        _
      // Predicated region
      $region21: #{belief_risk_estimator.1} parent=15 // pred_check
        %p133 = pneg %p70
      $region22: #{belief_risk_estimator.1} parent=15 // pred_check_branch
        %135 = sbr.rel (%p133) target = $region24
      $region23: #{belief_risk_estimator.1} parent=15 // pred_region
        %s136 = sadd.s32 %s15, %s16
        %p137 = scmp.lt.s32.totalorder %s136, 1
        %s138 = scalar_select %p137, %s136, 1
        %s139 = smul.addr %s138, 4
        %s140 = smul.addr %s139, 8
        %s141 = scalar_lea.vmem %s1, %s140
        %s142 = sadd.s32 %s15, %s16
      $region24: #{belief_risk_estimator.1} parent=15 // pred_fallthru
        _
    $region16: #{belief_risk_estimator.1} parent=5 // pred_fallthru
      _
    %p143 = scmp.le.s32.totalorder 1, %s8
    %p144 = scmp.lt.s32.totalorder %s8, 3
    %p145 = pnand %p143, %p144
    %p146 = pneg %p145
    // Predicated region
    $region25: #{belief_risk_estimator.1} parent=5 // pred_check
      _
    $region26: #{belief_risk_estimator.1} parent=5 // pred_check_branch
      %148 = sbr.rel (%p145) target = $region28
    $region27: #{belief_risk_estimator.1} parent=5 // pred_region
      %s149 = ssub.s32 %s8, 1
      %s150 = sadd.s32 %s17, %s18
      %s151 = smul.u32 4, %s150
      %p152 = scmp.lt.s32.totalorder %s151, 7
      %s153 = scalar_select %p152, %s151, 7
      %s154 = smul.addr %s153, 4
      %s155 = smul.addr %s154, 8
      %s156 = scalar_lea.vmem %s0, %s155
      %p157 = pneg %p48
      %p158 = pneg %p45
      %s159 = sadd.s32 %s17, %s18
      %p160 = scmp.lt.s32.totalorder %s159, 1
      %s161 = scalar_select %p160, %s159, 1
      %s162 = smul.addr %s161, 4
      %s163 = smul.addr %s162, 8
      %s164 = scalar_lea.vmem %s1, %s163
      %p165 = pneg %p76
      %p166 = pneg %p73
      %p167 = pneg %p102
      %p168 = pneg %p99
      %p169 = scmp.lt.s32.totalorder %s17, 1
      %s170 = scalar_select %p169, %s17, 1
      %s171 = smul.addr %s170, 8
      %s172 = scalar_lea.vmem %s2, %s171
      %s173 = sadd.s32 %s17, %s18
      %s174 = smul.u32 4, %s173
      %p175 = scmp.lt.s32.totalorder %s174, 7
      %s176 = scalar_select %p175, %s174, 7
      %s177 = smul.addr %s176, 4
      %s178 = smul.addr %s177, 8
      %s179 = scalar_lea.vmem %s0, %s178
      %s180 = sadd.s32 %s17, %s18
      %s181 = smul.u32 4, %s180
      %s182 = sadd.s32 %s17, %s18
      %p183 = scmp.lt.s32.totalorder %s182, 1
      %s184 = scalar_select %p183, %s182, 1
      %s185 = smul.addr %s184, 4
      %s186 = smul.addr %s185, 8
      %s187 = scalar_lea.vmem %s1, %s186
      %s188 = sadd.s32 %s17, %s18
      %p189 = scmp.lt.s32.totalorder %s17, 1
      %s190 = scalar_select %p189, %s17, 1
      %s191 = smul.addr %s190, 8
      %s192 = scalar_lea.vmem %s2, %s191
      %p193 = scmp.eq.s32.totalorder %s18, 0
      // Predicated region
      $region29: #{belief_risk_estimator.1} parent=27 // pred_check
        %p194 = pneg %p193
      $region30: #{belief_risk_estimator.1} parent=27 // pred_check_branch
        %196 = sbr.rel (%p194) target = $region32
      $region31: #{belief_risk_estimator.1} parent=27 // pred_region
        %197 = vst [vmem:[#allocation2] sm:$0xff] 0.0
        %198 = vst [vmem:[#allocation2 + $0x8] sm:$0xff] 0.0
        %199 = vst [vmem:[#allocation2 + $0x10] sm:$0xff] 0.0
        %200 = vst [vmem:[#allocation2 + $0x18] sm:$0xff] 0.0
      $region32: #{belief_risk_estimator.1} parent=27 // pred_fallthru
        _
      %v201 = vld [vmem:[%s179] sm:$0xff]
      %v202 = vld [vmem:[%s179 + $0x8] sm:$0xff]
      %v203 = vld [vmem:[%s179 + $0x10] sm:$0xff]
      %v204 = vld [vmem:[%s179 + $0x18] sm:$0xff]
      %v205 = vld [vmem:[%s179 + $0x20] sm:$0xff]
      %v206 = vld [vmem:[%s179 + $0x28] sm:$0xff]
      %v207 = vld [vmem:[%s179 + $0x30] sm:$0xff]
      %v208 = vld [vmem:[%s179 + $0x38] sm:$0xff]
      %v209 = vld [vmem:[%s179 + $0x40] sm:$0xff]
      %v210 = vld [vmem:[%s179 + $0x48] sm:$0xff]
      %v211 = vld [vmem:[%s179 + $0x50] sm:$0xff]
      %v212 = vld [vmem:[%s179 + $0x58] sm:$0xff]
      %v213 = vld [vmem:[%s179 + $0x60] sm:$0xff]
      %v214 = vld [vmem:[%s179 + $0x68] sm:$0xff]
      %v215 = vld [vmem:[%s179 + $0x70] sm:$0xff]
      %v216 = vld [vmem:[%s179 + $0x78] sm:$0xff]
      %v217 = vld [vmem:[%s187] sm:$0xff]
      %v218 = vld [vmem:[%s187 + $0x8] sm:$0xff]
      %v219 = vld [vmem:[%s187 + $0x10] sm:$0xff]
      %v220 = vld [vmem:[%s187 + $0x18] sm:$0xff]
      %v221 = vunpack.c.0.s8 %v217
      %v222 = vunpack.c.0.s8 %v218
      %v223 = vunpack.c.0.s8 %v219
      %v224 = vunpack.c.0.s8 %v220
      %v225 = vunpack.c.1.s8 %v217
      %v226 = vunpack.c.1.s8 %v218
      %v227 = vunpack.c.1.s8 %v219
      %v228 = vunpack.c.1.s8 %v220
      %v229 = vunpack.c.2.s8 %v217
      %v230 = vunpack.c.2.s8 %v218
      %v231 = vunpack.c.2.s8 %v219
      %v232 = vunpack.c.2.s8 %v220
      %v233 = vunpack.c.3.s8 %v217
      %v234 = vunpack.c.3.s8 %v218
      %v235 = vunpack.c.3.s8 %v219
      %v236 = vunpack.c.3.s8 %v220
      %vm237 = vcmp.eq.s32.totalorder %v221, 1
      %vm238 = vcmp.eq.s32.totalorder %v222, 1
      %vm239 = vcmp.eq.s32.totalorder %v223, 1
      %vm240 = vcmp.eq.s32.totalorder %v224, 1
      %vm241 = vcmp.eq.s32.totalorder %v225, 1
      %vm242 = vcmp.eq.s32.totalorder %v226, 1
      %vm243 = vcmp.eq.s32.totalorder %v227, 1
      %vm244 = vcmp.eq.s32.totalorder %v228, 1
      %vm245 = vcmp.eq.s32.totalorder %v229, 1
      %vm246 = vcmp.eq.s32.totalorder %v230, 1
      %vm247 = vcmp.eq.s32.totalorder %v231, 1
      %vm248 = vcmp.eq.s32.totalorder %v232, 1
      %vm249 = vcmp.eq.s32.totalorder %v233, 1
      %vm250 = vcmp.eq.s32.totalorder %v234, 1
      %vm251 = vcmp.eq.s32.totalorder %v235, 1
      %vm252 = vcmp.eq.s32.totalorder %v236, 1
      %v253 = vsel %vm237, 1, 0
      %v254 = vsel %vm238, 1, 0
      %v255 = vsel %vm239, 1, 0
      %v256 = vsel %vm240, 1, 0
      %v257 = vsel %vm241, 1, 0
      %v258 = vsel %vm242, 1, 0
      %v259 = vsel %vm243, 1, 0
      %v260 = vsel %vm244, 1, 0
      %v261 = vsel %vm245, 1, 0
      %v262 = vsel %vm246, 1, 0
      %v263 = vsel %vm247, 1, 0
      %v264 = vsel %vm248, 1, 0
      %v265 = vsel %vm249, 1, 0
      %v266 = vsel %vm250, 1, 0
      %v267 = vsel %vm251, 1, 0
      %v268 = vsel %vm252, 1, 0
      %v269 = vcvt.s32.f32 %v253
      %v270 = vcvt.s32.f32 %v254
      %v271 = vcvt.s32.f32 %v255
      %v272 = vcvt.s32.f32 %v256
      %v273 = vcvt.s32.f32 %v257
      %v274 = vcvt.s32.f32 %v258
      %v275 = vcvt.s32.f32 %v259
      %v276 = vcvt.s32.f32 %v260
      %v277 = vcvt.s32.f32 %v261
      %v278 = vcvt.s32.f32 %v262
      %v279 = vcvt.s32.f32 %v263
      %v280 = vcvt.s32.f32 %v264
      %v281 = vcvt.s32.f32 %v265
      %v282 = vcvt.s32.f32 %v266
      %v283 = vcvt.s32.f32 %v267
      %v284 = vcvt.s32.f32 %v268
      %vm285 = vcmp.eq.s32.totalorder %v221, 0
      %vm286 = vcmp.eq.s32.totalorder %v222, 0
      %vm287 = vcmp.eq.s32.totalorder %v223, 0
      %vm288 = vcmp.eq.s32.totalorder %v224, 0
      %vm289 = vcmp.eq.s32.totalorder %v225, 0
      %vm290 = vcmp.eq.s32.totalorder %v226, 0
      %vm291 = vcmp.eq.s32.totalorder %v227, 0
      %vm292 = vcmp.eq.s32.totalorder %v228, 0
      %vm293 = vcmp.eq.s32.totalorder %v229, 0
      %vm294 = vcmp.eq.s32.totalorder %v230, 0
      %vm295 = vcmp.eq.s32.totalorder %v231, 0
      %vm296 = vcmp.eq.s32.totalorder %v232, 0
      %vm297 = vcmp.eq.s32.totalorder %v233, 0
      %vm298 = vcmp.eq.s32.totalorder %v234, 0
      %vm299 = vcmp.eq.s32.totalorder %v235, 0
      %vm300 = vcmp.eq.s32.totalorder %v236, 0
      %v301 = vsel %vm285, 1, 0
      %v302 = vsel %vm286, 1, 0
      %v303 = vsel %vm287, 1, 0
      %v304 = vsel %vm288, 1, 0
      %v305 = vsel %vm289, 1, 0
      %v306 = vsel %vm290, 1, 0
      %v307 = vsel %vm291, 1, 0
      %v308 = vsel %vm292, 1, 0
      %v309 = vsel %vm293, 1, 0
      %v310 = vsel %vm294, 1, 0
      %v311 = vsel %vm295, 1, 0
      %v312 = vsel %vm296, 1, 0
      %v313 = vsel %vm297, 1, 0
      %v314 = vsel %vm298, 1, 0
      %v315 = vsel %vm299, 1, 0
      %v316 = vsel %vm300, 1, 0
      %v317 = vcvt.s32.f32 %v301
      %v318 = vcvt.s32.f32 %v302
      %v319 = vcvt.s32.f32 %v303
      %v320 = vcvt.s32.f32 %v304
      %v321 = vcvt.s32.f32 %v305
      %v322 = vcvt.s32.f32 %v306
      %v323 = vcvt.s32.f32 %v307
      %v324 = vcvt.s32.f32 %v308
      %v325 = vcvt.s32.f32 %v309
      %v326 = vcvt.s32.f32 %v310
      %v327 = vcvt.s32.f32 %v311
      %v328 = vcvt.s32.f32 %v312
      %v329 = vcvt.s32.f32 %v313
      %v330 = vcvt.s32.f32 %v314
      %v331 = vcvt.s32.f32 %v315
      %v332 = vcvt.s32.f32 %v316
      %v333 = vsub.f32 0.0, %v201
      %v334 = vsub.f32 0.0, %v202
      %v335 = vsub.f32 0.0, %v203
      %v336 = vsub.f32 0.0, %v204
      %v337 = vsub.f32 0.0, %v205
      %v338 = vsub.f32 0.0, %v206
      %v339 = vsub.f32 0.0, %v207
      %v340 = vsub.f32 0.0, %v208
      %v341 = vsub.f32 0.0, %v209
      %v342 = vsub.f32 0.0, %v210
      %v343 = vsub.f32 0.0, %v211
      %v344 = vsub.f32 0.0, %v212
      %v345 = vsub.f32 0.0, %v213
      %v346 = vsub.f32 0.0, %v214
      %v347 = vsub.f32 0.0, %v215
      %v348 = vsub.f32 0.0, %v216
      %v349 = vxor.u32 %v333, 2147483648
      %v350 = vxor.u32 %v334, 2147483648
      %v351 = vxor.u32 %v335, 2147483648
      %v352 = vxor.u32 %v336, 2147483648
      %v353 = vxor.u32 %v337, 2147483648
      %v354 = vxor.u32 %v338, 2147483648
      %v355 = vxor.u32 %v339, 2147483648
      %v356 = vxor.u32 %v340, 2147483648
      %v357 = vxor.u32 %v341, 2147483648
      %v358 = vxor.u32 %v342, 2147483648
      %v359 = vxor.u32 %v343, 2147483648
      %v360 = vxor.u32 %v344, 2147483648
      %v361 = vxor.u32 %v345, 2147483648
      %v362 = vxor.u32 %v346, 2147483648
      %v363 = vxor.u32 %v347, 2147483648
      %v364 = vxor.u32 %v348, 2147483648
      %v365 = vmul.f32 %v349, 1.442695
      %v366 = vpow.pop %v365
      %v367 = vmul.f32 %v350, 1.442695
      %v368 = vpow.pop %v367
      %v369 = vmul.f32 %v351, 1.442695
      %v370 = vpow.pop %v369
      %v371 = vmul.f32 %v352, 1.442695
      %v372 = vpow.pop %v371
      %v373 = vmul.f32 %v353, 1.442695
      %v374 = vpow.pop %v373
      %v375 = vmul.f32 %v354, 1.442695
      %v376 = vpow.pop %v375
      %v377 = vmul.f32 %v355, 1.442695
      %v378 = vpow.pop %v377
      %v379 = vmul.f32 %v356, 1.442695
      %v380 = vpow.pop %v379
      %v381 = vmul.f32 %v357, 1.442695
      %v382 = vpow.pop %v381
      %v383 = vmul.f32 %v358, 1.442695
      %v384 = vpow.pop %v383
      %v385 = vmul.f32 %v359, 1.442695
      %v386 = vpow.pop %v385
      %v387 = vmul.f32 %v360, 1.442695
      %v388 = vpow.pop %v387
      %v389 = vmul.f32 %v361, 1.442695
      %v390 = vpow.pop %v389
      %v391 = vmul.f32 %v362, 1.442695
      %v392 = vpow.pop %v391
      %v393 = vmul.f32 %v363, 1.442695
      %v394 = vpow.pop %v393
      %v395 = vmul.f32 %v364, 1.442695
      %v396 = vpow.pop %v395
      %v397 = vadd.f32 %v366, 1.0
      %v398 = vadd.f32 %v368, 1.0
      %v399 = vadd.f32 %v370, 1.0
      %v400 = vadd.f32 %v372, 1.0
      %v401 = vadd.f32 %v374, 1.0
      %v402 = vadd.f32 %v376, 1.0
      %v403 = vadd.f32 %v378, 1.0
      %v404 = vadd.f32 %v380, 1.0
      %v405 = vadd.f32 %v382, 1.0
      %v406 = vadd.f32 %v384, 1.0
      %v407 = vadd.f32 %v386, 1.0
      %v408 = vadd.f32 %v388, 1.0
      %v409 = vadd.f32 %v390, 1.0
      %v410 = vadd.f32 %v392, 1.0
      %v411 = vadd.f32 %v394, 1.0
      %v412 = vadd.f32 %v396, 1.0
      %v413 = vrcp.pop %v397
      %v414 = vmul.f32 1.0, %v413
      %v415 = vrcp.pop %v398
      %v416 = vmul.f32 1.0, %v415
      %v417 = vrcp.pop %v399
      %v418 = vmul.f32 1.0, %v417
      %v419 = vrcp.pop %v400
      %v420 = vmul.f32 1.0, %v419
      %v421 = vrcp.pop %v401
      %v422 = vmul.f32 1.0, %v421
      %v423 = vrcp.pop %v402
      %v424 = vmul.f32 1.0, %v423
      %v425 = vrcp.pop %v403
      %v426 = vmul.f32 1.0, %v425
      %v427 = vrcp.pop %v404
      %v428 = vmul.f32 1.0, %v427
      %v429 = vrcp.pop %v405
      %v430 = vmul.f32 1.0, %v429
      %v431 = vrcp.pop %v406
      %v432 = vmul.f32 1.0, %v431
      %v433 = vrcp.pop %v407
      %v434 = vmul.f32 1.0, %v433
      %v435 = vrcp.pop %v408
      %v436 = vmul.f32 1.0, %v435
      %v437 = vrcp.pop %v409
      %v438 = vmul.f32 1.0, %v437
      %v439 = vrcp.pop %v410
      %v440 = vmul.f32 1.0, %v439
      %v441 = vrcp.pop %v411
      %v442 = vmul.f32 1.0, %v441
      %v443 = vrcp.pop %v412
      %v444 = vmul.f32 1.0, %v443
      %v445 = vsub.f32 1.0, %v414
      %v446 = vsub.f32 1.0, %v416
      %v447 = vsub.f32 1.0, %v418
      %v448 = vsub.f32 1.0, %v420
      %v449 = vsub.f32 1.0, %v422
      %v450 = vsub.f32 1.0, %v424
      %v451 = vsub.f32 1.0, %v426
      %v452 = vsub.f32 1.0, %v428
      %v453 = vsub.f32 1.0, %v430
      %v454 = vsub.f32 1.0, %v432
      %v455 = vsub.f32 1.0, %v434
      %v456 = vsub.f32 1.0, %v436
      %v457 = vsub.f32 1.0, %v438
      %v458 = vsub.f32 1.0, %v440
      %v459 = vsub.f32 1.0, %v442
      %v460 = vsub.f32 1.0, %v444
      %v461 = vmul.f32 %v414, %v269
      %v462 = vmul.f32 %v416, %v270
      %v463 = vmul.f32 %v418, %v271
      %v464 = vmul.f32 %v420, %v272
      %v465 = vmul.f32 %v422, %v273
      %v466 = vmul.f32 %v424, %v274
      %v467 = vmul.f32 %v426, %v275
      %v468 = vmul.f32 %v428, %v276
      %v469 = vmul.f32 %v430, %v277
      %v470 = vmul.f32 %v432, %v278
      %v471 = vmul.f32 %v434, %v279
      %v472 = vmul.f32 %v436, %v280
      %v473 = vmul.f32 %v438, %v281
      %v474 = vmul.f32 %v440, %v282
      %v475 = vmul.f32 %v442, %v283
      %v476 = vmul.f32 %v444, %v284
      %v477 = vadd.f32 %v461, %v465
      %v478 = vadd.f32 %v477, %v469
      %v479 = vadd.f32 %v478, %v473
      %v480 = vrot.slane %v479, 4
      %v481 = vadd.f32 %v479, %v480
      %v482 = vrot.slane %v481, 2
      %v483 = vadd.f32 %v481, %v482
      %v484 = vrot.slane %v483, 1
      %v485 = vadd.f32 %v483, %v484
      %v486 = vadd.f32 %v462, %v466
      %v487 = vadd.f32 %v486, %v470
      %v488 = vadd.f32 %v487, %v474
      %v489 = vrot.slane %v488, 4
      %v490 = vadd.f32 %v488, %v489
      %v491 = vrot.slane %v490, 2
      %v492 = vadd.f32 %v490, %v491
      %v493 = vrot.slane %v492, 1
      %v494 = vadd.f32 %v492, %v493
      %v495 = vadd.f32 %v463, %v467
      %v496 = vadd.f32 %v495, %v471
      %v497 = vadd.f32 %v496, %v475
      %v498 = vrot.slane %v497, 4
      %v499 = vadd.f32 %v497, %v498
      %v500 = vrot.slane %v499, 2
      %v501 = vadd.f32 %v499, %v500
      %v502 = vrot.slane %v501, 1
      %v503 = vadd.f32 %v501, %v502
      %v504 = vadd.f32 %v464, %v468
      %v505 = vadd.f32 %v504, %v472
      %v506 = vadd.f32 %v505, %v476
      %v507 = vrot.slane %v506, 4
      %v508 = vadd.f32 %v506, %v507
      %v509 = vrot.slane %v508, 2
      %v510 = vadd.f32 %v508, %v509
      %v511 = vrot.slane %v510, 1
      %v512 = vadd.f32 %v510, %v511
      %v513 = vadd.f32 %v269, %v273
      %v514 = vadd.f32 %v513, %v277
      %v515 = vadd.f32 %v514, %v281
      %v516 = vrot.slane %v515, 4
      %v517 = vadd.f32 %v515, %v516
      %v518 = vrot.slane %v517, 2
      %v519 = vadd.f32 %v517, %v518
      %v520 = vrot.slane %v519, 1
      %v521 = vadd.f32 %v519, %v520
      %v522 = vadd.f32 %v270, %v274
      %v523 = vadd.f32 %v522, %v278
      %v524 = vadd.f32 %v523, %v282
      %v525 = vrot.slane %v524, 4
      %v526 = vadd.f32 %v524, %v525
      %v527 = vrot.slane %v526, 2
      %v528 = vadd.f32 %v526, %v527
      %v529 = vrot.slane %v528, 1
      %v530 = vadd.f32 %v528, %v529
      %v531 = vadd.f32 %v271, %v275
      %v532 = vadd.f32 %v531, %v279
      %v533 = vadd.f32 %v532, %v283
      %v534 = vrot.slane %v533, 4
      %v535 = vadd.f32 %v533, %v534
      %v536 = vrot.slane %v535, 2
      %v537 = vadd.f32 %v535, %v536
      %v538 = vrot.slane %v537, 1
      %v539 = vadd.f32 %v537, %v538
      %v540 = vadd.f32 %v272, %v276
      %v541 = vadd.f32 %v540, %v280
      %v542 = vadd.f32 %v541, %v284
      %v543 = vrot.slane %v542, 4
      %v544 = vadd.f32 %v542, %v543
      %v545 = vrot.slane %v544, 2
      %v546 = vadd.f32 %v544, %v545
      %v547 = vrot.slane %v546, 1
      %v548 = vadd.f32 %v546, %v547
      %v549 = vmul.f32 %v461, %v317
      %v550 = vmul.f32 %v462, %v318
      %v551 = vmul.f32 %v463, %v319
      %v552 = vmul.f32 %v464, %v320
      %v553 = vmul.f32 %v465, %v321
      %v554 = vmul.f32 %v466, %v322
      %v555 = vmul.f32 %v467, %v323
      %v556 = vmul.f32 %v468, %v324
      %v557 = vmul.f32 %v469, %v325
      %v558 = vmul.f32 %v470, %v326
      %v559 = vmul.f32 %v471, %v327
      %v560 = vmul.f32 %v472, %v328
      %v561 = vmul.f32 %v473, %v329
      %v562 = vmul.f32 %v474, %v330
      %v563 = vmul.f32 %v475, %v331
      %v564 = vmul.f32 %v476, %v332
      %v565 = vadd.f32 %v549, %v553
      %v566 = vadd.f32 %v565, %v557
      %v567 = vadd.f32 %v566, %v561
      %v568 = vrot.slane %v567, 4
      %v569 = vadd.f32 %v567, %v568
      %v570 = vrot.slane %v569, 2
      %v571 = vadd.f32 %v569, %v570
      %v572 = vrot.slane %v571, 1
      %v573 = vadd.f32 %v571, %v572
      %v574 = vadd.f32 %v550, %v554
      %v575 = vadd.f32 %v574, %v558
      %v576 = vadd.f32 %v575, %v562
      %v577 = vrot.slane %v576, 4
      %v578 = vadd.f32 %v576, %v577
      %v579 = vrot.slane %v578, 2
      %v580 = vadd.f32 %v578, %v579
      %v581 = vrot.slane %v580, 1
      %v582 = vadd.f32 %v580, %v581
      %v583 = vadd.f32 %v551, %v555
      %v584 = vadd.f32 %v583, %v559
      %v585 = vadd.f32 %v584, %v563
      %v586 = vrot.slane %v585, 4
      %v587 = vadd.f32 %v585, %v586
      %v588 = vrot.slane %v587, 2
      %v589 = vadd.f32 %v587, %v588
      %v590 = vrot.slane %v589, 1
      %v591 = vadd.f32 %v589, %v590
      %v592 = vadd.f32 %v552, %v556
      %v593 = vadd.f32 %v592, %v560
      %v594 = vadd.f32 %v593, %v564
      %v595 = vrot.slane %v594, 4
      %v596 = vadd.f32 %v594, %v595
      %v597 = vrot.slane %v596, 2
      %v598 = vadd.f32 %v596, %v597
      %v599 = vrot.slane %v598, 1
      %v600 = vadd.f32 %v598, %v599
      %v601 = vmul.f32 %v445, %v317
      %v602 = vmul.f32 %v446, %v318
      %v603 = vmul.f32 %v447, %v319
      %v604 = vmul.f32 %v448, %v320
      %v605 = vmul.f32 %v449, %v321
      %v606 = vmul.f32 %v450, %v322
      %v607 = vmul.f32 %v451, %v323
      %v608 = vmul.f32 %v452, %v324
      %v609 = vmul.f32 %v453, %v325
      %v610 = vmul.f32 %v454, %v326
      %v611 = vmul.f32 %v455, %v327
      %v612 = vmul.f32 %v456, %v328
      %v613 = vmul.f32 %v457, %v329
      %v614 = vmul.f32 %v458, %v330
      %v615 = vmul.f32 %v459, %v331
      %v616 = vmul.f32 %v460, %v332
      %v617 = vmul.f32 %v601, %v317
      %v618 = vmul.f32 %v602, %v318
      %v619 = vmul.f32 %v603, %v319
      %v620 = vmul.f32 %v604, %v320
      %v621 = vmul.f32 %v605, %v321
      %v622 = vmul.f32 %v606, %v322
      %v623 = vmul.f32 %v607, %v323
      %v624 = vmul.f32 %v608, %v324
      %v625 = vmul.f32 %v609, %v325
      %v626 = vmul.f32 %v610, %v326
      %v627 = vmul.f32 %v611, %v327
      %v628 = vmul.f32 %v612, %v328
      %v629 = vmul.f32 %v613, %v329
      %v630 = vmul.f32 %v614, %v330
      %v631 = vmul.f32 %v615, %v331
      %v632 = vmul.f32 %v616, %v332
      %v633 = vadd.f32 %v617, %v621
      %v634 = vadd.f32 %v633, %v625
      %v635 = vadd.f32 %v634, %v629
      %v636 = vrot.slane %v635, 4
      %v637 = vadd.f32 %v635, %v636
      %v638 = vrot.slane %v637, 2
      %v639 = vadd.f32 %v637, %v638
      %v640 = vrot.slane %v639, 1
      %v641 = vadd.f32 %v639, %v640
      %v642 = vadd.f32 %v618, %v622
      %v643 = vadd.f32 %v642, %v626
      %v644 = vadd.f32 %v643, %v630
      %v645 = vrot.slane %v644, 4
      %v646 = vadd.f32 %v644, %v645
      %v647 = vrot.slane %v646, 2
      %v648 = vadd.f32 %v646, %v647
      %v649 = vrot.slane %v648, 1
      %v650 = vadd.f32 %v648, %v649
      %v651 = vadd.f32 %v619, %v623
      %v652 = vadd.f32 %v651, %v627
      %v653 = vadd.f32 %v652, %v631
      %v654 = vrot.slane %v653, 4
      %v655 = vadd.f32 %v653, %v654
      %v656 = vrot.slane %v655, 2
      %v657 = vadd.f32 %v655, %v656
      %v658 = vrot.slane %v657, 1
      %v659 = vadd.f32 %v657, %v658
      %v660 = vadd.f32 %v620, %v624
      %v661 = vadd.f32 %v660, %v628
      %v662 = vadd.f32 %v661, %v632
      %v663 = vrot.slane %v662, 4
      %v664 = vadd.f32 %v662, %v663
      %v665 = vrot.slane %v664, 2
      %v666 = vadd.f32 %v664, %v665
      %v667 = vrot.slane %v666, 1
      %v668 = vadd.f32 %v666, %v667
      %v669 = vadd.f32 %v317, %v321
      %v670 = vadd.f32 %v669, %v325
      %v671 = vadd.f32 %v670, %v329
      %v672 = vrot.slane %v671, 4
      %v673 = vadd.f32 %v671, %v672
      %v674 = vrot.slane %v673, 2
      %v675 = vadd.f32 %v673, %v674
      %v676 = vrot.slane %v675, 1
      %v677 = vadd.f32 %v675, %v676
      %v678 = vadd.f32 %v318, %v322
      %v679 = vadd.f32 %v678, %v326
      %v680 = vadd.f32 %v679, %v330
      %v681 = vrot.slane %v680, 4
      %v682 = vadd.f32 %v680, %v681
      %v683 = vrot.slane %v682, 2
      %v684 = vadd.f32 %v682, %v683
      %v685 = vrot.slane %v684, 1
      %v686 = vadd.f32 %v684, %v685
      %v687 = vadd.f32 %v319, %v323
      %v688 = vadd.f32 %v687, %v327
      %v689 = vadd.f32 %v688, %v331
      %v690 = vrot.slane %v689, 4
      %v691 = vadd.f32 %v689, %v690
      %v692 = vrot.slane %v691, 2
      %v693 = vadd.f32 %v691, %v692
      %v694 = vrot.slane %v693, 1
      %v695 = vadd.f32 %v693, %v694
      %v696 = vadd.f32 %v320, %v324
      %v697 = vadd.f32 %v696, %v328
      %v698 = vadd.f32 %v697, %v332
      %v699 = vrot.slane %v698, 4
      %v700 = vadd.f32 %v698, %v699
      %v701 = vrot.slane %v700, 2
      %v702 = vadd.f32 %v700, %v701
      %v703 = vrot.slane %v702, 1
      %v704 = vadd.f32 %v702, %v703
      %v705 = vld [vmem:[#allocation2] sm:$0xff]
      %v706 = vld [vmem:[#allocation2 + $0x8] sm:$0xff]
      %v707 = vld [vmem:[#allocation2 + $0x10] sm:$0xff]
      %v708 = vld [vmem:[#allocation2 + $0x18] sm:$0xff]
      %vm709 = vcmask 1040384
      %v710 = vsel %vm709, %v485, %v521
      %v711 = vsel %vm709, %v494, %v530
      %v712 = vsel %vm709, %v503, %v539
      %v713 = vsel %vm709, %v512, %v548
      %vm714 = vcmask 1041408
      %v715 = vsel %vm714, %v710, %v573
      %v716 = vsel %vm714, %v711, %v582
      %v717 = vsel %vm714, %v712, %v591
      %v718 = vsel %vm714, %v713, %v600
      %vm719 = vcmask 1042432
      %v720 = vsel %vm719, %v715, %v641
      %v721 = vsel %vm719, %v716, %v650
      %v722 = vsel %vm719, %v717, %v659
      %v723 = vsel %vm719, %v718, %v668
      %vm724 = vcmask 1043456
      %v725 = vsel %vm724, %v720, %v677
      %v726 = vsel %vm724, %v721, %v686
      %v727 = vsel %vm724, %v722, %v695
      %v728 = vsel %vm724, %v723, %v704
      %vm729 = vcmask 1044480
      %v730 = vsel %vm729, %v725, 0.0
      %v731 = vsel %vm729, %v726, 0.0
      %v732 = vsel %vm729, %v727, 0.0
      %v733 = vsel %vm729, %v728, 0.0
      %v734 = vadd.f32 %v705, %v730
      %v735 = vadd.f32 %v706, %v731
      %v736 = vadd.f32 %v707, %v732
      %v737 = vadd.f32 %v708, %v733
      %738 = vst [vmem:[#allocation2] sm:$0xff] %v734
      %739 = vst [vmem:[#allocation2 + $0x8] sm:$0xff] %v735
      %740 = vst [vmem:[#allocation2 + $0x10] sm:$0xff] %v736
      %741 = vst [vmem:[#allocation2 + $0x18] sm:$0xff] %v737
      // Predicated region
      $region33: #{belief_risk_estimator.1} parent=27 // pred_check
        %p742 = pneg %p193
      $region34: #{belief_risk_estimator.1} parent=27 // pred_check_branch
        %744 = sbr.rel (%p742) target = $region36
      $region35: #{belief_risk_estimator.1} parent=27 // pred_region
        %v745 = vld [vmem:[#allocation2] sm:$0xff]
        %v746 = vld [vmem:[#allocation2 + $0x8] sm:$0xff]
        %v747 = vld [vmem:[#allocation2 + $0x10] sm:$0xff]
        %v748 = vld [vmem:[#allocation2 + $0x18] sm:$0xff]
        %v749 = vadd.f32 %v745, %v746
        %v750 = vadd.f32 %v749, %v747
        %v751 = vadd.f32 %v750, %v748
        %752 = vadd.xlane.f32.xlu0 %v751
        %v753 = vpop.xlane.xlu0 %752
        %vm754 = vcmask 7168
        %755 = vst.msk [vmem:[%s192] sm:$0xff] %vm754, %v753
      $region36: #{belief_risk_estimator.1} parent=27 // pred_fallthru
        _
      %p756 = scmp.lt.s32.totalorder %s17, 1
      %s757 = scalar_select %p756, %s17, 1
      %s758 = smul.addr %s757, 8
      %s759 = scalar_lea.vmem %s2, %s758
      // Predicated region
      $region37: #{belief_risk_estimator.1} parent=27 // pred_check
        %p760 = pneg %p99
      $region38: #{belief_risk_estimator.1} parent=27 // pred_check_branch
        %762 = sbr.rel (%p760) target = $region40
      $region39: #{belief_risk_estimator.1} parent=27 // pred_region
        _
      $region40: #{belief_risk_estimator.1} parent=27 // pred_fallthru
        _
    $region28: #{belief_risk_estimator.1} parent=5 // pred_fallthru
      _
    %p763 = scmp.le.s32.totalorder 2, %s8
    // Predicated region
    $region41: #{belief_risk_estimator.1} parent=5 // pred_check
      %p764 = pneg %p763
    $region42: #{belief_risk_estimator.1} parent=5 // pred_check_branch
      %766 = sbr.rel (%p764) target = $region44
    $region43: #{belief_risk_estimator.1} parent=5 // pred_region
      %s767 = ssub.s32 %s8, 2
      // Predicated region
      $region45: #{belief_risk_estimator.1} parent=43 // pred_check
        %p768 = pneg %p105
      $region46: #{belief_risk_estimator.1} parent=43 // pred_check_branch
        %770 = sbr.rel (%p768) target = $region48
      $region47: #{belief_risk_estimator.1} parent=43 // pred_region
        %p771 = scmp.lt.s32.totalorder %s19, 1
        %s772 = scalar_select %p771, %s19, 1
        %s773 = smul.addr %s772, 8
        %s774 = scalar_lea.vmem %s2, %s773
      $region48: #{belief_risk_estimator.1} parent=43 // pred_fallthru
        _
    $region44: #{belief_risk_estimator.1} parent=5 // pred_fallthru
      _
  $region6: #{belief_risk_estimator.1} parent=0 // loop_footer
    %s12 = sadd.s32 1, %s8
  $region7: #{belief_risk_estimator.1} parent=0 // loop_footer_branch
    %7 = sbr.rel target = $region3
  $region8: #{belief_risk_estimator.1} parent=0 // loop_exit
    _

</llo_original>
